<compile_context>
chip_gen: v6e
topology: v6e:2x2x1
jax: 0.10.0
libtpu: 0.0.40
codegen_flags: <defaults>
</compile_context>

<pallas_src>
import math

import jax
import jax.numpy as jnp
from jax import lax
from jax.experimental import pallas as pl
from jax.experimental.pallas import tpu as pltpu


# ----------------------------------------------------------------------------
# GraphConv + ReLU
# ----------------------------------------------------------------------------
def _graphconv_relu_kernel(a_ref, x_ref, wrel_ref, wroot_ref, b_ref, o_ref):
    # PyG GraphConv: relu( lin_rel(A @ x) + lin_root(x) ); no lane concat.
    x = x_ref[...]
    agg = jnp.dot(a_ref[...], x, preferred_element_type=jnp.float32)
    y = (jnp.dot(agg, wrel_ref[...], preferred_element_type=jnp.float32)
         + jnp.dot(x, wroot_ref[...], preferred_element_type=jnp.float32)
         + b_ref[...])
    o_ref[...] = jnp.maximum(y, 0.0)


def graphconv_relu(a, x, w_rel, w_root, b):
    N = x.shape[0]
    C = w_rel.shape[1]
    return pl.pallas_call(
        _graphconv_relu_kernel,
        out_shape=jax.ShapeDtypeStruct((N, C), jnp.float32),
    )(a, x, w_rel, w_root, b)


# ----------------------------------------------------------------------------
# Sequence branch: 2x Conv1d (fused block-diag) + ReLU + concat + avg_pool1d(5)
# ----------------------------------------------------------------------------
def _seq_branch_kernel(x_ref, w_ref, b_ref, pa_ref, pb_ref, o_ref):
    # x_ref: (L, Cc) channel-concat input; w_ref: (K, Cc, 2*O) block-diagonal.
    # Output cols [0:O] == conv_a path, [O:2O] == conv_b path; the original
    # length-concat + avg_pool1d(5) is realised as pool_a@ya + pool_b@yb.
    K = w_ref.shape[0]
    O2 = w_ref.shape[2]
    O = O2 // 2
    Lout = x_ref.shape[0] - K + 1
    x = x_ref[...]
    acc = jnp.zeros((Lout, O2), jnp.float32)
    for k in range(K):                                           # K=3, static
        acc = acc + jnp.dot(x[k:k + Lout, :], w_ref[k],
                            preferred_element_type=jnp.float32)
    y = jnp.maximum(acc + b_ref[...], 0.0)                       # (Lout, 2O)
    o_ref[...] = (jnp.dot(pa_ref[...], y[:, :O],
                          preferred_element_type=jnp.float32)
                  + jnp.dot(pb_ref[...], y[:, O:],
                            preferred_element_type=jnp.float32))  # (Tp, O)


def seq_branch(target, target01, w_blk, b_cat):
    """Conv1d+ReLU (x2, fused) + length-concat + avg_pool1d(5). -> (B, Tp, O)."""
    B, Ca, La = target.shape
    _, Cb, Lb = target01.shape
    K, Cc, O2 = w_blk.shape
    O = O2 // 2
    Lout = La - K + 1                     # 99
    Lcat = 2 * Lout                       # 198
    Tp = Lcat // 5                        # 39
    xa = target.transpose(0, 2, 1)        # NCL -> NLC
    xb = target01.transpose(0, 2, 1)
    xcat = jnp.concatenate([xa, xb], axis=-1)                    # (B, L, Cc)
    rows = jnp.arange(Tp)[:, None]
    cols = jnp.arange(Lout)[None, :]
    pool_a = jnp.where((cols >= 5 * rows) & (cols < 5 * (rows + 1)),
                       0.2, 0.0).astype(jnp.float32)             # (Tp, Lout)
    colsb = cols + Lout
    pool_b = jnp.where((colsb >= 5 * rows) & (colsb < 5 * (rows + 1)),
                       0.2, 0.0).astype(jnp.float32)             # (Tp, Lout)
    return pl.pallas_call(
        _seq_branch_kernel,
        grid=(B,),
        in_specs=[
            pl.BlockSpec((None, La, Cc), lambda b: (b, 0, 0)),
            pl.BlockSpec((K, Cc, O2), lambda b: (0, 0, 0)),
            pl.BlockSpec((1, O2), lambda b: (0, 0)),
            pl.BlockSpec((Tp, Lout), lambda b: (0, 0)),
            pl.BlockSpec((Tp, Lout), lambda b: (0, 0)),
        ],
        out_specs=pl.BlockSpec((None, Tp, O), lambda b: (b, 0, 0)),
        out_shape=jax.ShapeDtypeStruct((B, Tp, O), jnp.float32),
        compiler_params=pltpu.CompilerParams(dimension_semantics=("parallel",)),
    )(xcat, w_blk, b_cat, pool_a, pool_b)


# ----------------------------------------------------------------------------
# Bidirectional GRU — single body, both directions interleaved, block-diag W_hh
# ----------------------------------------------------------------------------
def _bigru_kernel(x_ref, wih_ref, whh_ref, bih_ref, bhh_ref, o_ref, gx_scr):
    # x_ref:  (T*Bp, 2F)   rows t*Bp..t*Bp+B-1 = [x_fwd(t) | x_bwd(t)], rest 0
    # wih:    (2F, 6*HP)   block-diag, gate cols [r_f|r_b|z_f|z_b|n_f|n_b]
    # whh:    (2*HP, 6*HP) block-diag over [h_f | h_b]
    # o_ref:  (T, B, 2*HP) PyTorch bi-GRU output layout (time-major)
    T, B, HP2 = o_ref.shape
    HP = HP2 // 2
    Bp = x_ref.shape[0] // T
    G = 3 * HP2                      # 6*HP
    # Fused gx precompute: one MXU matmul for all steps & both directions.
    gx_scr[...] = (jnp.dot(x_ref[...], wih_ref[...],
                           preferred_element_type=jnp.float32) + bih_ref[...])
    whh = whh_ref[...]
    bhh = bhh_ref[...]
    h = jnp.zeros((Bp, HP2), jnp.float32)        # [h_fwd | h_bwd], padded rows 0
    for t in range(T):               # fully unrolled, static & 8-aligned indices
        gx = gx_scr[t * Bp:(t + 1) * Bp, :]                      # (Bp, 6*HP)
        gh = jnp.dot(h, whh, preferred_element_type=jnp.float32) + bhh
        r = jax.nn.sigmoid(gx[:, 0:HP2] + gh[:, 0:HP2])
        z = jax.nn.sigmoid(gx[:, HP2:2 * HP2] + gh[:, HP2:2 * HP2])
        n = jnp.tanh(gx[:, 2 * HP2:G] + r * gh[:, 2 * HP2:G])
        h = (1.0 - z) * n + z * h                # padded lanes/rows stay finite
        o_ref[t, :, :HP] = h[:B, :HP]            # forward hidden at time t
        o_ref[T - 1 - t, :, HP:] = h[:B, HP:]    # backward hidden for pos T-1-t


def bigru(x_seq, gru_p, hidden=120, hp=128):
    """Bidirectional single-layer GRU, batch_first; returns (B, T, 2*hidden)."""
    B, T, F = x_seq.shape
    Bp = ((B + 7) // 8) * 8                      # sublane-align per-step rows
    fwd = x_seq.transpose(1, 0, 2)               # (T, B, F)
    bwd = x_seq[:, ::-1, :].transpose(1, 0, 2)   # (T, B, F)
    x_pair = jnp.concatenate([fwd, bwd], axis=-1)            # (T, B, 2F)
    x_pair = jnp.pad(x_pair, ((0, 0), (0, Bp - B), (0, 0)))
    x_pair = x_pair.reshape(T * Bp, 2 * F)
    out = pl.pallas_call(
        _bigru_kernel,
        out_shape=jax.ShapeDtypeStruct((T, B, 2 * hp), jnp.float32),
        scratch_shapes=[pltpu.VMEM((T * Bp, 6 * hp), jnp.float32)],
    )(x_pair, gru_p["w_ih"], gru_p["w_hh"], gru_p["b_ih"], gru_p["b_hh"])
    h_f = out[:, :, :hidden].transpose(1, 0, 2)               # (B, T, H)
    h_b = out[:, :, hp:hp + hidden].transpose(1, 0, 2)
    return jnp.concatenate([h_f, h_b], axis=-1)               # (B, T, 2H)


# ----------------------------------------------------------------------------
# Head: dense_1 (bf16 weight, K-tiled) + ReLU + dense_3 + log_softmax
# ----------------------------------------------------------------------------
def _head_kernel(x_ref, w1_ref, b1_ref, w2_ref, b2_ref, o_ref, acc_ref):
    k = pl.program_id(0)

    @pl.when(k == 0)
    def _():
        acc_ref[...] = jnp.zeros_like(acc_ref)

    acc_ref[...] += jnp.dot(x_ref[...], w1_ref[...],
                            preferred_element_type=jnp.float32)

    @pl.when(k == pl.num_programs(0) - 1)
    def _():
        h = jnp.maximum(acc_ref[...] + b1_ref[...], 0.0)  # dropout -> identity
        z = jnp.dot(h, w2_ref[...],
                    preferred_element_type=jnp.float32) + b2_ref[...]
        m = jnp.max(z, axis=-1, keepdims=True)
        lse = jnp.log(jnp.sum(jnp.exp(z - m), axis=-1, keepdims=True)) + m
        o_ref[...] = z - lse


def head(x, w1, b1, w2, b2, *, tk=2432):
    M, Kin = x.shape
    Kp, C = w1.shape                               # (9728, 128) bf16
    N = w2.shape[1]
    xq = jnp.pad(x, ((0, 0), (0, Kp - Kin))).astype(jnp.bfloat16)
    nk = Kp // tk
    return pl.pallas_call(
        _head_kernel,
        grid=(nk,),
        in_specs=[
            pl.BlockSpec((M, tk), lambda k: (0, k)),
            pl.BlockSpec((tk, C), lambda k: (k, 0)),
            pl.BlockSpec((1, C), lambda k: (0, 0)),
            pl.BlockSpec((C, N), lambda k: (0, 0)),
            pl.BlockSpec((1, N), lambda k: (0, 0)),
        ],
        out_specs=pl.BlockSpec((M, N), lambda k: (0, 0)),
        out_shape=jax.ShapeDtypeStruct((M, N), jnp.float32),
        scratch_shapes=[pltpu.VMEM((M, C), jnp.float32)],
        compiler_params=pltpu.CompilerParams(dimension_semantics=("arbitrary",)),
    )(xq, w1, b1, w2, b2)


# ----------------------------------------------------------------------------
# Glue (data-dependent graph ops) — plain JAX
# ----------------------------------------------------------------------------
def topk_pool(x, A, sizes, ratio, p_weight):
    """TopKPooling: score = tanh(x.p / ||p||); keep top ceil(ratio*n) per graph."""
    score = jnp.tanh((x @ p_weight) / jnp.linalg.norm(p_weight))
    perms, new_sizes, off = [], [], 0
    for n in sizes:
        k = int(math.ceil(ratio * n))
        _, idx = lax.top_k(score[off:off + n], k)
        perms.append(idx + off)
        new_sizes.append(k)
        off += n
    perm = jnp.concatenate(perms)
    x_new = x[perm] * score[perm][:, None]
    A_new = A[perm][:, perm]                # filter_adj + relabel
    return x_new, A_new, new_sizes


def global_pools(x, sizes):
    """global_max_pool / global_mean_pool per graph (contiguous segments)."""
    maxs, means, off = [], [], 0
    for n in sizes:
        seg = x[off:off + n]
        maxs.append(jnp.max(seg, axis=0))
        means.append(jnp.mean(seg, axis=0))
        off += n
    return jnp.stack(maxs), jnp.stack(means)


# ----------------------------------------------------------------------------
# Parameters
# ----------------------------------------------------------------------------
def _pad_gate_cols(w, H, HP):
    """Zero-pad each of the 3 gate blocks (r,z,n) along the last dim H -> HP."""
    parts = [jnp.pad(w[:, g * H:(g + 1) * H], ((0, 0), (0, HP - H)))
             for g in range(3)]
    return jnp.concatenate(parts, axis=-1)


def _interleave_dirs(f, b, HP):
    """[r|z|n] per-direction (rows, 3*HP) -> combined [r_f|r_b|z_f|z_b|n_f|n_b]."""
    parts = []
    for g in range(3):
        parts.append(f[:, g * HP:(g + 1) * HP])
        parts.append(b[:, g * HP:(g + 1) * HP])
    return jnp.concatenate(parts, axis=-1)


def init_params(key):
    ks = jax.random.split(key, 24)
    s = 0.05

    def nrm(k, shape):
        return jax.random.normal(k, shape, dtype=jnp.float32) * s

    H, HP = 120, 128
    p = {}
    # GraphConv 1/2: separate rel/root weights (no lane-concat in kernel).
    p["gc1_w_rel"] = nrm(ks[0], (4, 128))
    p["gc1_w_root"] = nrm(ks[22], (4, 128))
    p["gc1_b"] = nrm(ks[1], (1, 128))
    p["pool1_p"] = nrm(ks[2], (128,))
    p["gc2_w_rel"] = nrm(ks[3], (128, 128))
    p["gc2_w_root"] = nrm(ks[23], (128, 128))
    p["gc2_b"] = nrm(ks[4], (1, 128))
    p["pool2_p"] = nrm(ks[5], (128,))

    # Conv1d weights in (K, C_in, C_out) layout, fused block-diagonal per tap:
    # rows 0:30 -> cols 0:128 (conv1d path), rows 30:114 -> cols 128:256.
    wa = nrm(ks[6], (3, 30, 128))
    ba = nrm(ks[7], (1, 128))
    wb = nrm(ks[8], (3, 84, 128))
    bb = nrm(ks[9], (1, 128))
    w_blk = jnp.zeros((3, 114, 256), jnp.float32)
    w_blk = w_blk.at[:, :30, :128].set(wa)
    w_blk = w_blk.at[:, 30:, 128:].set(wb)
    p["c_w"] = w_blk
    p["c_b"] = jnp.concatenate([ba, bb], axis=-1)             # (1, 256)

    # GRU: per-direction w_ih_t (F,3H), w_hh_t (H,3H), biases (1,3H); gates
    # zero-padded to 128 lanes, then fused into block-diagonal bidirectional
    # weights with gate layout [r_f|r_b|z_f|z_b|n_f|n_b] over [h_f|h_b].
    def gru_dir(k0, k1, k2, k3):
        w_ih_t = nrm(k0, (128, 3 * H))
        w_hh_t = nrm(k1, (H, 3 * H))
        b_ih = nrm(k2, (1, 3 * H))
        b_hh = nrm(k3, (1, 3 * H))
        w_ih_p = _pad_gate_cols(w_ih_t, H, HP)                        # (128, 384)
        w_hh_p = _pad_gate_cols(jnp.pad(w_hh_t, ((0, HP - H), (0, 0))), H, HP)
        return w_ih_p, w_hh_p, _pad_gate_cols(b_ih, H, HP), _pad_gate_cols(b_hh, H, HP)

    f = gru_dir(ks[10], ks[11], ks[12], ks[13])
    b = gru_dir(ks[14], ks[15], ks[16], ks[17])
    z_ih = jnp.zeros_like(f[0])
    z_hh = jnp.zeros_like(f[1])
    p["gru"] = {
        "w_ih": jnp.concatenate([_interleave_dirs(f[0], z_ih, HP),
                                 _interleave_dirs(z_ih, b[0], HP)], axis=0),  # (256, 768)
        "w_hh": jnp.concatenate([_interleave_dirs(f[1], z_hh, HP),
                                 _interleave_dirs(z_hh, b[1], HP)], axis=0),  # (256, 768)
        "b_ih": _interleave_dirs(f[2], b[2], HP),                             # (1, 768)
        "b_hh": _interleave_dirs(f[3], b[3], HP),                             # (1, 768)
    }

    # Head: dense_1 (9616 -> 102) padded to 9728x128 and stored in bf16
    # (f32 MXU accumulation); dense_3 rows padded so padded lanes are inert.
    KH, KHp = 9616, 9728
    p["d1_w"] = jnp.pad(nrm(ks[18], (KH, 102)),
                        ((0, KHp - KH), (0, 26))).astype(jnp.bfloat16)
    p["d1_b"] = jnp.pad(nrm(ks[19], (1, 102)), ((0, 0), (0, 26)))
    p["d3_w"] = jnp.pad(nrm(ks[20], (102, 2)), ((0, 26), (0, 0)))
    p["d3_b"] = nrm(ks[21], (1, 2))
    return p


# ----------------------------------------------------------------------------
# Model forward
# ----------------------------------------------------------------------------
def forward(params, x, A, sizes, target, target01):
    # ---- graph branch ----
    h = graphconv_relu(A, x, params["gc1_w_rel"], params["gc1_w_root"], params["gc1_b"])
    h, A1, sizes1 = topk_pool(h, A, sizes, 0.8, params["pool1_p"])
    gmp1, gap1 = global_pools(h, sizes1)
    x1 = jnp.concatenate([gmp1, gap1], axis=1)                   # (G, 256)

    h = graphconv_relu(A1, h, params["gc2_w_rel"], params["gc2_w_root"], params["gc2_b"])
    h, _, sizes2 = topk_pool(h, A1, sizes1, 0.8, params["pool2_p"])
    gmp2, gap2 = global_pools(h, sizes2)
    x2 = jnp.concatenate([gmp2, gap2], axis=1)                   # (G, 256)
    xg = x1 + x2

    # ---- sequence branch (conv x2 + relu + concat + avg_pool, fused) ----
    xt = seq_branch(target, target01, params["c_w"], params["c_b"])   # (B, 39, 128)
    # dropout p=0.5 -> identity (eval mode)
    xt = bigru(xt, params["gru"], hidden=120, hp=128)            # (B, 39, 240)
    # dropout p=0.5 -> identity (eval mode)
    xt = xt.reshape(xt.shape[0], -1)                             # (B, 9360)

    # ---- head (dense_1 + relu + dense_3 + log_softmax, fused, K-tiled) ----
    xc = jnp.concatenate([xg, xt], axis=1)                       # (B, 9616)
    return head(xc, params["d1_w"], params["d1_b"],
                params["d3_w"], params["d3_b"])                  # (B, 2)


def build_graph(key, sizes, feat_dim):
    """Ring graph per sample, bidirected edges; dense adjacency A[dst, src]."""
    N = sum(sizes)
    x = jax.random.normal(key, (N, feat_dim), dtype=jnp.float32)
    src, dst, off = [], [], 0
    for n in sizes:
        for i in range(n):
            j = (i + 1) % n
            src += [off + i, off + j]
            dst += [off + j, off + i]
        off += n
    A = jnp.zeros((N, N), dtype=jnp.float32)
    A = A.at[jnp.array(dst), jnp.array(src)].add(1.0)
    return x, A


if __name__ == "__main__":
    key = jax.random.PRNGKey(0)
    k_graph, k_t1, k_t2, k_params = jax.random.split(key, 4)

    sizes = [10, 10]                  # two graphs, 10 nodes each, feat dim 4
    B = len(sizes)
    x, A = build_graph(k_graph, sizes, 4)
    target = jax.random.normal(k_t1, (B, 30, 101), dtype=jnp.float32)
    target01 = jax.random.normal(k_t2, (B, 84, 101), dtype=jnp.float32)

    params = init_params(k_params)
    out = forward(params, x, A, sizes, target, target01)
    out = jax.block_until_ready(out)

    assert out.shape == (B, 2), out.shape
    assert bool(jnp.all(jnp.isfinite(out)))
    # rows of log_softmax should exp-sum to 1
    assert bool(jnp.allclose(jnp.exp(out).sum(-1), 1.0, atol=1e-4))
    print("KERNEL_OK")
</pallas_src>

<mosaic_0001>
module attributes {stable_mosaic.version = 11 : i64} {
  func.func @_graphconv_relu_kernel(%arg0: memref<20x20xf32, #tpu.memory_space<vmem>>, %arg1: memref<20x4xf32, #tpu.memory_space<vmem>>, %arg2: memref<4x128xf32, #tpu.memory_space<vmem>>, %arg3: memref<4x128xf32, #tpu.memory_space<vmem>>, %arg4: memref<1x128xf32, #tpu.memory_space<vmem>>, %arg5: memref<20x128xf32, #tpu.memory_space<vmem>>) attributes {dimension_semantics = [], scalar_prefetch = 0 : i64, scratch_operands = 0 : i64, tpu.core_type = #tpu.core_type<tc>} {
    %c0 = arith.constant 0 : index
    %c0_0 = arith.constant 0 : index
    %0 = vector.load %arg1[%c0, %c0_0] : memref<20x4xf32, #tpu.memory_space<vmem>>, vector<20x4xf32>
    %c0_1 = arith.constant 0 : index
    %c0_2 = arith.constant 0 : index
    %1 = vector.load %arg0[%c0_1, %c0_2] : memref<20x20xf32, #tpu.memory_space<vmem>>, vector<20x20xf32>
    %cst = arith.constant dense<0.000000e+00> : vector<20x4xf32>
    %2 = tpu.matmul %1, %0, %cst {dimension_numbers = #tpu.dot_dimension_numbers<[1], [0], [0], [1], [0, 0, 1, 1], [], []>} : vector<20x20xf32>, vector<20x4xf32>, vector<20x4xf32> -> vector<20x4xf32>
    %c0_3 = arith.constant 0 : index
    %c0_4 = arith.constant 0 : index
    %3 = vector.load %arg2[%c0_3, %c0_4] : memref<4x128xf32, #tpu.memory_space<vmem>>, vector<4x128xf32>
    %cst_5 = arith.constant dense<0.000000e+00> : vector<20x128xf32>
    %4 = tpu.matmul %2, %3, %cst_5 {dimension_numbers = #tpu.dot_dimension_numbers<[1], [0], [0], [1], [0, 0, 1, 1], [], []>} : vector<20x4xf32>, vector<4x128xf32>, vector<20x128xf32> -> vector<20x128xf32>
    %c0_6 = arith.constant 0 : index
    %c0_7 = arith.constant 0 : index
    %5 = vector.load %arg3[%c0_6, %c0_7] : memref<4x128xf32, #tpu.memory_space<vmem>>, vector<4x128xf32>
    %cst_8 = arith.constant dense<0.000000e+00> : vector<20x128xf32>
    %6 = tpu.matmul %0, %5, %cst_8 {dimension_numbers = #tpu.dot_dimension_numbers<[1], [0], [0], [1], [0, 0, 1, 1], [], []>} : vector<20x4xf32>, vector<4x128xf32>, vector<20x128xf32> -> vector<20x128xf32>
    %7 = arith.addf %4, %6 : vector<20x128xf32>
    %c0_9 = arith.constant 0 : index
    %c0_10 = arith.constant 0 : index
    %8 = vector.load %arg4[%c0_9, %c0_10] : memref<1x128xf32, #tpu.memory_space<vmem>>, vector<1x128xf32>
    %9 = vector.broadcast %8 : vector<1x128xf32> to vector<20x128xf32>
    %10 = arith.addf %7, %9 : vector<20x128xf32>
    %cst_11 = arith.constant 0.000000e+00 : f32
    %11 = vector.broadcast %cst_11 : f32 to vector<20x128xf32>
    %12 = arith.maximumf %10, %11 : vector<20x128xf32>
    %c0_12 = arith.constant 0 : index
    %c0_13 = arith.constant 0 : index
    %13 = vector.load %arg5[%c0_12, %c0_13] : memref<20x128xf32, #tpu.memory_space<vmem>>, vector<20x128xf32>
    tpu.vector_store %arg5[%c0_12, %c0_13], %12 {strides = array<i32>} : memref<20x128xf32, #tpu.memory_space<vmem>>, vector<20x128xf32>,
    return
  }
}

</mosaic_0001>

<llo_original>
// kernel: tpu_custom_call.1
$region0: #{tpu_custom_call.1}
  #allocation0 [shape = 'u32[]', space=smem, size = 0x4, offset = 0x4, fixed_abs, tag = 'smem constant byte address 0x4 - core index']
  #allocation1 [shape = 'u32[144,128]{1,0:T(1,128)}', space=vmem, size = 0x12000, scoped, tag = 'internal scratch']
  %s0 = inlined_call_operand.vmem [shape: f32[20,20], index: 0, kind: input, shape index: {}]
  %s1 = inlined_call_operand.vmem [shape: f32[20,4], index: 1, kind: input, shape index: {}]
  %s2 = inlined_call_operand.vmem [shape: f32[4,128], index: 2, kind: input, shape index: {}]
  %s3 = inlined_call_operand.vmem [shape: f32[4,128], index: 3, kind: input, shape index: {}]
  %s4 = inlined_call_operand.vmem [shape: f32[1,128], index: 4, kind: input, shape index: {}]
  %s5 = inlined_call_operand.hbm [shape: f32[20,128], index: 5, kind: output, shape index: {}]
  %s6 = sld [smem:[#allocation0]]
  $region30: #{tpu_custom_call.1} parent=0
    _
  %s8 = ssub.s32 1, %s6
  %s9 = scalar_select 0, %s8, %s6
  $region1: #{tpu_custom_call.1} parent=0
    #allocation2 [shape = 'u8[12288]{0}', space=vmem, size = 0x3000, scoped, tag = 'output window, operand 0, single buffered']
    #allocation3 [shape = 's32[1]{0}', space=sflag, size = 0x4, scoped, tag = 'scoped memory for tpu_custom_call.1']
    %10 = vsyncpa [#allocation3], 0
    // Predicated region
    $region2: #{tpu_custom_call.1} parent=1 // pred_check
      _
    $region3: #{tpu_custom_call.1} parent=1 // pred_check_branch
      %12 = sbr.rel (0) target = $region5
    $region4: #{tpu_custom_call.1} parent=1 // pred_region
      _
    $region5: #{tpu_custom_call.1} parent=1 // pred_fallthru
      _
    // Predicated region
    $region6: #{tpu_custom_call.1} parent=1 // pred_check
      _
    $region7: #{tpu_custom_call.1} parent=1 // pred_check_branch
      %14 = sbr.rel (0) target = $region9
    $region8: #{tpu_custom_call.1} parent=1 // pred_region
      _
    $region9: #{tpu_custom_call.1} parent=1 // pred_fallthru
      _
    // Predicated region
    $region10: #{tpu_custom_call.1} parent=1 // pred_check
      _
    $region11: #{tpu_custom_call.1} parent=1 // pred_check_branch
      %16 = sbr.rel (0) target = $region13
    $region12: #{tpu_custom_call.1} parent=1 // pred_region
      _
    $region13: #{tpu_custom_call.1} parent=1 // pred_fallthru
      _
    // Predicated region
    $region14: #{tpu_custom_call.1} parent=1 // pred_check
      _
    $region15: #{tpu_custom_call.1} parent=1 // pred_check_branch
      %18 = sbr.rel (0) target = $region17
    $region16: #{tpu_custom_call.1} parent=1 // pred_region
      _
    $region17: #{tpu_custom_call.1} parent=1 // pred_fallthru
      _
    // Predicated region
    $region18: #{tpu_custom_call.1} parent=1 // pred_check
      _
    $region19: #{tpu_custom_call.1} parent=1 // pred_check_branch
      %20 = sbr.rel (0) target = $region21
    $region20: #{tpu_custom_call.1} parent=1 // pred_region
      _
    $region21: #{tpu_custom_call.1} parent=1 // pred_fallthru
      _
    %v21 = vld [vmem:[%s1] sm:$0xff]
    %v22 = vld [vmem:[%s1 + $0x8] sm:$0xff]
    %v23 = vld [vmem:[%s1 + $0x10] sm:$0xf]
    %v24 = vld [vmem:[%s0] sm:$0xff]
    %v25 = vld [vmem:[%s0 + $0x8] sm:$0xff]
    %v26 = vld [vmem:[%s0 + $0x10] sm:$0xf]
    %vm27 = vcmask 162816
    %v29 = vsel %vm27, %v24, 0
    %v32 = vsel %vm27, %v25, 0
    %v35 = vsel %vm27, %v26, 0
    %vm37 = vcmask 1043456
    %v39 = vsel %vm37, %v23, 0
    %41 = vmatprep.subr.mxu0 0.0
    %42 = vmatpush1.msra.mxu0 0.0
    %43 = vmatprep.subr.mxu0 0.0
    %44 = vmatpush1.msra.mxu0 0.0
    %45 = vmatprep.subr.mxu0 0.0
    %46 = vmatpush1.msra.mxu0 0.0
    %47 = vmatprep.subr.mxu0 0.0
    %48 = vmatpush1.msra.mxu0 0.0
    %49 = vmatprep.subr.mxu0 0.0
    %50 = vmatpush1.msra.mxu0 0.0
    %51 = vmatprep.subr.mxu0 0.0
    %52 = vmatpush1.msra.mxu0 0.0
    %53 = vmatprep.subr.mxu0 0.0
    %54 = vmatpush1.msra.mxu0 0.0
    %55 = vmatprep.subr.mxu0 0.0
    %56 = vmatpush1.msra.mxu0 0.0
    %57 = vmatprep.subr.mxu0 0.0
    %58 = vmatpush1.msra.mxu0 0.0
    %59 = vmatprep.subr.mxu0 0.0
    %60 = vmatpush1.msra.mxu0 0.0
    %61 = vmatprep.subr.mxu0 0.0
    %62 = vmatpush1.msra.mxu0 0.0
    %63 = vmatprep.subr.mxu0 0.0
    %64 = vmatpush1.msra.mxu0 0.0
    %65 = vmatprep.subr.mxu0 0.0
    %66 = vmatpush1.msra.mxu0 0.0
    %67 = vmatprep.subr.mxu0 0.0
    %68 = vmatpush1.msra.mxu0 %v39
    %69 = vmatprep.subr.mxu0 0.0
    %70 = vmatpush1.msra.mxu0 %v22
    %71 = vmatprep.subr.mxu0 0.0
    %72 = vmatpush1.msra.mxu0 %v21
    %73 = vmatprep.subr.mxu0 0.0
    %74 = vmatpush2.msra.mxu0 0.0
    %75 = vmatprep.subr.mxu0 0.0
    %76 = vmatpush2.msra.mxu0 0.0
    %77 = vmatprep.subr.mxu0 0.0
    %78 = vmatpush2.msra.mxu0 0.0
    %79 = vmatprep.subr.mxu0 0.0
    %80 = vmatpush2.msra.mxu0 0.0
    %81 = vmatprep.subr.mxu0 0.0
    %82 = vmatpush2.msra.mxu0 0.0
    %83 = vmatprep.subr.mxu0 0.0
    %84 = vmatpush2.msra.mxu0 0.0
    %85 = vmatprep.subr.mxu0 0.0
    %86 = vmatpush2.msra.mxu0 0.0
    %87 = vmatprep.subr.mxu0 0.0
    %88 = vmatpush2.msra.mxu0 0.0
    %89 = vmatprep.subr.mxu0 0.0
    %90 = vmatpush2.msra.mxu0 0.0
    %91 = vmatprep.subr.mxu0 0.0
    %92 = vmatpush2.msra.mxu0 0.0
    %93 = vmatprep.subr.mxu0 0.0
    %94 = vmatpush2.msra.mxu0 0.0
    %95 = vmatprep.subr.mxu0 0.0
    %96 = vmatpush2.msra.mxu0 0.0
    %97 = vmatprep.subr.mxu0 0.0
    %98 = vmatpush2.msra.mxu0 0.0
    %99 = vmatprep.subr.mxu0 0.0
    %100 = vmatpush2.msra.mxu0 0.0
    %101 = vmatprep.subr.mxu0 0.0
    %102 = vmatpush2.msra.mxu0 0.0
    %103 = vmatprep.subr.mxu0 0.0
    %104 = vmatpush2.msra.mxu0 0.0
    %105 = vmatprep.mubr.f32.mxu0 0.0
    %106 = vmatmul.mubr.f32.gmra.mxu0 %v29
    %v107 = vpop.f32.mrf.mxu0
    %v108 = vadd.f32 0.0, %v107
    %v109 = vpop.f32.mrf.mxu0
    %110 = vmatprep.mubr.f32.mxu0 0.0
    %111 = vmatmul.mubr.f32.gmra.mxu0 %v32
    %v112 = vpop.f32.mrf.mxu0
    %v113 = vadd.f32 0.0, %v112
    %v114 = vpop.f32.mrf.mxu0
    %115 = vmatprep.mubr.f32.mxu0 0.0
    %116 = vmatmul.mubr.f32.gmra.mxu0 %v35
    %v117 = vpop.f32.mrf.mxu0
    %v118 = vadd.f32 0.0, %v117
    %v119 = vpop.f32.mrf.mxu0
    %120 = vdwg.mxu0
    %v121 = vld [vmem:[%s2] sm:$0xf]
    %v122 = vld [vmem:[%s3] sm:$0xf]
    %vm123 = vcmask 31744
    %v125 = vsel %vm123, %v21, 0
    %v128 = vsel %vm123, %v22, 0
    %v130 = vsel %vm123, %v23, 0
    %v133 = vsel %vm37, %v122, 0
    %135 = vmatprep.subr.mxu0 0.0
    %136 = vmatpush1.msra.mxu0 0.0
    %137 = vmatprep.subr.mxu0 0.0
    %138 = vmatpush1.msra.mxu0 0.0
    %139 = vmatprep.subr.mxu0 0.0
    %140 = vmatpush1.msra.mxu0 0.0
    %141 = vmatprep.subr.mxu0 0.0
    %142 = vmatpush1.msra.mxu0 0.0
    %143 = vmatprep.subr.mxu0 0.0
    %144 = vmatpush1.msra.mxu0 0.0
    %145 = vmatprep.subr.mxu0 0.0
    %146 = vmatpush1.msra.mxu0 0.0
    %147 = vmatprep.subr.mxu0 0.0
    %148 = vmatpush1.msra.mxu0 0.0
    %149 = vmatprep.subr.mxu0 0.0
    %150 = vmatpush1.msra.mxu0 0.0
    %151 = vmatprep.subr.mxu0 0.0
    %152 = vmatpush1.msra.mxu0 0.0
    %153 = vmatprep.subr.mxu0 0.0
    %154 = vmatpush1.msra.mxu0 0.0
    %155 = vmatprep.subr.mxu0 0.0
    %156 = vmatpush1.msra.mxu0 0.0
    %157 = vmatprep.subr.mxu0 0.0
    %158 = vmatpush1.msra.mxu0 0.0
    %159 = vmatprep.subr.mxu0 0.0
    %160 = vmatpush1.msra.mxu0 0.0
    %161 = vmatprep.subr.mxu0 0.0
    %162 = vmatpush1.msra.mxu0 0.0
    %163 = vmatprep.subr.mxu0 0.0
    %164 = vmatpush1.msra.mxu0 0.0
    %165 = vmatprep.subr.mxu0 0.0
    %166 = vmatpush1.msra.mxu0 %v133
    %167 = vmatprep.subr.mxu0 0.0
    %168 = vmatpush2.msra.mxu0 0.0
    %169 = vmatprep.subr.mxu0 0.0
    %170 = vmatpush2.msra.mxu0 0.0
    %171 = vmatprep.subr.mxu0 0.0
    %172 = vmatpush2.msra.mxu0 0.0
    %173 = vmatprep.subr.mxu0 0.0
    %174 = vmatpush2.msra.mxu0 0.0
    %175 = vmatprep.subr.mxu0 0.0
    %176 = vmatpush2.msra.mxu0 0.0
    %177 = vmatprep.subr.mxu0 0.0
    %178 = vmatpush2.msra.mxu0 0.0
    %179 = vmatprep.subr.mxu0 0.0
    %180 = vmatpush2.msra.mxu0 0.0
    %181 = vmatprep.subr.mxu0 0.0
    %182 = vmatpush2.msra.mxu0 0.0
    %183 = vmatprep.subr.mxu0 0.0
    %184 = vmatpush2.msra.mxu0 0.0
    %185 = vmatprep.subr.mxu0 0.0
    %186 = vmatpush2.msra.mxu0 0.0
    %187 = vmatprep.subr.mxu0 0.0
    %188 = vmatpush2.msra.mxu0 0.0
    %189 = vmatprep.subr.mxu0 0.0
    %190 = vmatpush2.msra.mxu0 0.0
    %191 = vmatprep.subr.mxu0 0.0
    %192 = vmatpush2.msra.mxu0 0.0
    %193 = vmatprep.subr.mxu0 0.0
    %194 = vmatpush2.msra.mxu0 0.0
    %195 = vmatprep.subr.mxu0 0.0
    %196 = vmatpush2.msra.mxu0 0.0
    %197 = vmatprep.subr.mxu0 0.0
    %198 = vmatpush2.msra.mxu0 0.0
    %199 = vmatprep.mubr.f32.mxu0 0.0
    %200 = vmatmul.mubr.f32.gmra.mxu0 %v125
    %v201 = vpop.f32.mrf.mxu0
    %v202 = vadd.f32 0.0, %v201
    %v203 = vpop.f32.mrf.mxu0
    %204 = vmatprep.mubr.f32.mxu0 0.0
    %205 = vmatmul.mubr.f32.gmra.mxu0 %v128
    %v206 = vpop.f32.mrf.mxu0
    %v207 = vadd.f32 0.0, %v206
    %v208 = vpop.f32.mrf.mxu0
    %209 = vmatprep.mubr.f32.mxu0 0.0
    %210 = vmatmul.mubr.f32.gmra.mxu0 %v130
    %v211 = vpop.f32.mrf.mxu0
    %v212 = vadd.f32 0.0, %v211
    %v213 = vpop.f32.mrf.mxu0
    %214 = vdwg.mxu0
    %v216 = vsel %vm123, %v108, 0
    %v219 = vsel %vm123, %v113, 0
    %v222 = vsel %vm123, %v118, 0
    %v225 = vsel %vm37, %v121, 0
    %227 = vmatprep.subr.mxu0 0.0
    %228 = vmatpush1.msra.mxu0 0.0
    %229 = vmatprep.subr.mxu0 0.0
    %230 = vmatpush1.msra.mxu0 0.0
    %231 = vmatprep.subr.mxu0 0.0
    %232 = vmatpush1.msra.mxu0 0.0
    %233 = vmatprep.subr.mxu0 0.0
    %234 = vmatpush1.msra.mxu0 0.0
    %235 = vmatprep.subr.mxu0 0.0
    %236 = vmatpush1.msra.mxu0 0.0
    %237 = vmatprep.subr.mxu0 0.0
    %238 = vmatpush1.msra.mxu0 0.0
    %239 = vmatprep.subr.mxu0 0.0
    %240 = vmatpush1.msra.mxu0 0.0
    %241 = vmatprep.subr.mxu0 0.0
    %242 = vmatpush1.msra.mxu0 0.0
    %243 = vmatprep.subr.mxu0 0.0
    %244 = vmatpush1.msra.mxu0 0.0
    %245 = vmatprep.subr.mxu0 0.0
    %246 = vmatpush1.msra.mxu0 0.0
    %247 = vmatprep.subr.mxu0 0.0
    %248 = vmatpush1.msra.mxu0 0.0
    %249 = vmatprep.subr.mxu0 0.0
    %250 = vmatpush1.msra.mxu0 0.0
    %251 = vmatprep.subr.mxu0 0.0
    %252 = vmatpush1.msra.mxu0 0.0
    %253 = vmatprep.subr.mxu0 0.0
    %254 = vmatpush1.msra.mxu0 0.0
    %255 = vmatprep.subr.mxu0 0.0
    %256 = vmatpush1.msra.mxu0 0.0
    %257 = vmatprep.subr.mxu0 0.0
    %258 = vmatpush1.msra.mxu0 %v225
    %259 = vmatprep.subr.mxu0 0.0
    %260 = vmatpush2.msra.mxu0 0.0
    %261 = vmatprep.subr.mxu0 0.0
    %262 = vmatpush2.msra.mxu0 0.0
    %263 = vmatprep.subr.mxu0 0.0
    %264 = vmatpush2.msra.mxu0 0.0
    %265 = vmatprep.subr.mxu0 0.0
    %266 = vmatpush2.msra.mxu0 0.0
    %267 = vmatprep.subr.mxu0 0.0
    %268 = vmatpush2.msra.mxu0 0.0
    %269 = vmatprep.subr.mxu0 0.0
    %270 = vmatpush2.msra.mxu0 0.0
    %271 = vmatprep.subr.mxu0 0.0
    %272 = vmatpush2.msra.mxu0 0.0
    %273 = vmatprep.subr.mxu0 0.0
    %274 = vmatpush2.msra.mxu0 0.0
    %275 = vmatprep.subr.mxu0 0.0
    %276 = vmatpush2.msra.mxu0 0.0
    %277 = vmatprep.subr.mxu0 0.0
    %278 = vmatpush2.msra.mxu0 0.0
    %279 = vmatprep.subr.mxu0 0.0
    %280 = vmatpush2.msra.mxu0 0.0
    %281 = vmatprep.subr.mxu0 0.0
    %282 = vmatpush2.msra.mxu0 0.0
    %283 = vmatprep.subr.mxu0 0.0
    %284 = vmatpush2.msra.mxu0 0.0
    %285 = vmatprep.subr.mxu0 0.0
    %286 = vmatpush2.msra.mxu0 0.0
    %287 = vmatprep.subr.mxu0 0.0
    %288 = vmatpush2.msra.mxu0 0.0
    %289 = vmatprep.subr.mxu0 0.0
    %290 = vmatpush2.msra.mxu0 0.0
    %291 = vmatprep.mubr.f32.mxu0 0.0
    %292 = vmatmul.mubr.f32.gmra.mxu0 %v216
    %v293 = vpop.f32.mrf.mxu0
    %v294 = vadd.f32 %v202, %v293
    %v295 = vpop.f32.mrf.mxu0
    %296 = vmatprep.mubr.f32.mxu0 0.0
    %297 = vmatmul.mubr.f32.gmra.mxu0 %v219
    %v298 = vpop.f32.mrf.mxu0
    %v299 = vadd.f32 %v207, %v298
    %v300 = vpop.f32.mrf.mxu0
    %301 = vmatprep.mubr.f32.mxu0 0.0
    %302 = vmatmul.mubr.f32.gmra.mxu0 %v222
    %v303 = vpop.f32.mrf.mxu0
    %v304 = vadd.f32 %v212, %v303
    %v305 = vpop.f32.mrf.mxu0
    %306 = vdwg.mxu0
    %v307 = vld [vmem:[%s4] sm:$0x1]
    %v309 = vlaneseq
    %v310 = vshrl.u32 %v309, 7
    %v311 = vsub.s32 0, %v310
    %v312 = vrot.slane %v307, %v311
    %v314 = vadd.f32 %v294, %v312
    %v315 = vadd.f32 %v299, %v312
    %v316 = vadd.f32 %v304, %v312
    %v317 = vmax.f32 %v314, 0.0
    %v318 = vmax.f32 %v315, 0.0
    %v319 = vmax.f32 %v316, 0.0
    %320 = vst [vmem:[#allocation2] sm:$0xff] %v317
    %321 = vst [vmem:[#allocation2 + $0x8] sm:$0xff] %v318
    %322 = vst [vmem:[#allocation2 + $0x10] sm:$0xf] %v319
    // Predicated region
    $region22: #{tpu_custom_call.1} parent=1 // pred_check
      _
    $region23: #{tpu_custom_call.1} parent=1 // pred_check_branch
      %324 = sbr.rel (0) target = $region25
    $region24: #{tpu_custom_call.1} parent=1 // pred_region
      %s326 = ssub.s32 384, 384
      %327 = vsyncadd [#allocation3], %s326
      %s328 = sshll.u32 [#allocation2], 4
      %s329 = int_to_ptr.vmem [resolvable:$true] %s328
      %334 = dma.vmem_to_hbm [thread:$0]  %s329, 384, %s5, [#allocation3], 128, 128, 8
    $region25: #{tpu_custom_call.1} parent=1 // pred_fallthru
      _
    // Predicated region
    $region26: #{tpu_custom_call.1} parent=1 // pred_check
      _
    $region27: #{tpu_custom_call.1} parent=1 // pred_check_branch
      %336 = sbr.rel (0) target = $region29
    $region28: #{tpu_custom_call.1} parent=1 // pred_region
      %337 = dma.done [#allocation3], 384
    $region29: #{tpu_custom_call.1} parent=1 // pred_fallthru
      _
    %338 = vsyncpa [#allocation3], 1

</llo_original>
